<compile_context>
chip_gen: v6e
topology: v6e:2x2x1
jax: 0.10.0
libtpu: 0.0.40
codegen_flags: <defaults>
</compile_context>

<pallas_src>
import functools

import jax
import jax.numpy as jnp
from jax.experimental import pallas as pl
from jax.experimental.pallas import tpu as pltpu


# ---------------------------------------------------------------------------
# Kernels
# ---------------------------------------------------------------------------

def _conv_down_kernel(pa_ref, pb_ref, w_ref, b_ref, o_ref):
    # pa_ref: (1, tOH, OWp, 4C)  row-pair window for this tile
    # pb_ref: (1, 1,   OWp, 4C)  boundary row-pair (first row-pair of next tile)
    # w_ref : (9C, C)            im2col weight, rows in (kh, kw, cin) order
    # b_ref : (1, C)             bias
    # o_ref : (1, tOH, OW,  C)   output tile
    _, tOH, OW, C = o_ref.shape

    pa = pa_ref[...][0]                               # (tOH,   OWp, 4C)
    pb = pb_ref[...][0]                               # (1,     OWp, 4C)
    win = jnp.concatenate([pa, pb], axis=0)           # (tOH+1, OWp, 4C)

    # Build im2col patches in (kh, kw, cin) column order (matches w_ref rows).
    # Phase slot of pixel (2oh+kh, 2ow+kw) inside the s2d layout is
    #   (kh%2)*2C + (kw%2)*C, at spatial offset (kh//2, kw//2).
    # For each kh the kw=0 and kw=1 taps are one contiguous 2C lane slice at
    # dc=0; only kw=2 needs a separate C slice at dc=1 -> 6 slices, not 9.
    pieces = []
    for kh in range(3):
        dr, dh = kh // 2, kh % 2
        base = dh * 2 * C
        pieces.append(win[dr:dr + tOH, 0:OW, base:base + 2 * C])   # kw = 0, 1
        pieces.append(win[dr:dr + tOH, 1:1 + OW, base:base + C])   # kw = 2
    patches = jnp.concatenate(pieces, axis=-1)                      # (tOH, OW, 9C)
    patches = patches.reshape(tOH * OW, 9 * C)

    # One MXU matmul with contraction dim 9C, f32 accumulation.
    acc = jnp.dot(
        patches,
        w_ref[...],
        preferred_element_type=jnp.float32,
        precision=jax.lax.Precision.HIGHEST,
    )
    acc = acc + b_ref[...].astype(jnp.float32)                      # (1, C) bcast
    o_ref[...] = acc.reshape(1, tOH, OW, C).astype(o_ref.dtype)


def _avgpool_kernel(p_ref, o_ref):
    # p_ref: (1, tOH, OW, 4C) space-to-depth input; o_ref: (1, tOH, OW, C)
    _, tOH, OW, C = o_ref.shape
    p = p_ref[...][0].astype(jnp.float32)                           # (tOH, OW, 4C)
    s = (p[:, :, 0:C] + p[:, :, C:2 * C]
         + p[:, :, 2 * C:3 * C] + p[:, :, 3 * C:4 * C])
    o_ref[...] = (s * 0.25).reshape(1, tOH, OW, C).astype(o_ref.dtype)


# ---------------------------------------------------------------------------
# Wrapper
# ---------------------------------------------------------------------------

def _largest_divisor_at_most(n, cap):
    cap = max(1, min(n, int(cap)))
    t = cap
    while n % t:
        t -= 1
    return t


def _space_to_depth(x_nchw, oh, ow):
    """(N,C,>=2*oh,>=2*ow) NCHW -> (N, oh, ow, 4C) with 2x2 phases on lanes."""
    n, c = x_nchw.shape[0], x_nchw.shape[1]
    p = x_nchw.reshape(n, c, oh, 2, ow, 2)
    p = jnp.transpose(p, (0, 2, 4, 3, 5, 1))          # (N, oh, ow, dh, dw, C)
    return p.reshape(n, oh, ow, 4 * c)


@functools.partial(jax.jit, static_argnums=(1,), static_argnames=("row_tile",))
def downsample(x_nchw, with_conv, weight=None, bias=None, *, row_tile=None):
    """Pallas implementation of Downsample.forward.

    x_nchw : (N, C, H, W)
    weight : (C, C, 3, 3)  PyTorch OIHW, required if with_conv
    bias   : (C,)          required if with_conv
    returns (N, C, H//2, W//2)
    """
    N, C, H, W = x_nchw.shape
    OH, OW = H // 2, W // 2
    isz = jnp.dtype(x_nchw.dtype).itemsize

    if with_conv:
        OHp, OWp = OH + 1, OW + 1
        # Fold the (bottom=1, right=1) zero pad into the space-to-depth copy.
        xp = jnp.pad(
            x_nchw, ((0, 0), (0, 0), (0, 2 * OHp - H), (0, 2 * OWp - W)))
        p = _space_to_depth(xp, OHp, OWp)             # (N, OHp, OWp, 4C)
        w9 = jnp.transpose(weight, (2, 3, 1, 0)).reshape(9 * C, C)  # (9C, C)
        b2 = bias.reshape(1, C)

        if row_tile is None:
            # Per-output-row VMEM footprint (double-buffered I/O + intermediates).
            row_bytes = (2 * OWp * 4 * C * isz          # input window
                         + 2 * OW * C * isz             # output tile
                         + OW * 9 * C * 4               # im2col patches (f32)
                         + OW * C * 4)                  # accumulator
            row_tile = _largest_divisor_at_most(
                OH, (6 * 1024 * 1024) // max(row_bytes, 1))
        tOH = row_tile
        assert OH % tOH == 0, "row_tile must divide OH"

        out = pl.pallas_call(
            _conv_down_kernel,
            out_shape=jax.ShapeDtypeStruct((N, OH, OW, C), x_nchw.dtype),
            grid_spec=pltpu.PrefetchScalarGridSpec(
                num_scalar_prefetch=0,
                grid=(N, OH // tOH),
                in_specs=[
                    # main row-pair window for this tile
                    pl.BlockSpec((1, tOH, OWp, 4 * C),
                                 lambda n, i: (n, i, 0, 0)),
                    # boundary row-pair (block size 1 => block idx == row idx)
                    pl.BlockSpec((1, 1, OWp, 4 * C),
                                 lambda n, i: (n, (i + 1) * tOH, 0, 0)),
                    pl.BlockSpec((9 * C, C), lambda n, i: (0, 0)),
                    pl.BlockSpec((1, C), lambda n, i: (0, 0)),
                ],
                out_specs=pl.BlockSpec((1, tOH, OW, C),
                                       lambda n, i: (n, i, 0, 0)),
            ),
            compiler_params=pltpu.CompilerParams(
                dimension_semantics=("parallel", "parallel"),
                vmem_limit_bytes=32 * 1024 * 1024,
            ),
        )(p, p, w9, b2)
    else:
        # floor behaviour of avg_pool2d(k=2, s=2): drop trailing odd row/col.
        xs = x_nchw[:, :, :2 * OH, :2 * OW]
        p = _space_to_depth(xs, OH, OW)               # (N, OH, OW, 4C)

        if row_tile is None:
            row_bytes = 2 * OW * 4 * C * isz + 2 * OW * C * isz + OW * 4 * C * 4
            row_tile = _largest_divisor_at_most(
                OH, (6 * 1024 * 1024) // max(row_bytes, 1))
        tOH = row_tile
        assert OH % tOH == 0, "row_tile must divide OH"

        out = pl.pallas_call(
            _avgpool_kernel,
            out_shape=jax.ShapeDtypeStruct((N, OH, OW, C), x_nchw.dtype),
            grid_spec=pltpu.PrefetchScalarGridSpec(
                num_scalar_prefetch=0,
                grid=(N, OH // tOH),
                in_specs=[pl.BlockSpec((1, tOH, OW, 4 * C),
                                       lambda n, i: (n, i, 0, 0))],
                out_specs=pl.BlockSpec((1, tOH, OW, C),
                                       lambda n, i: (n, i, 0, 0)),
            ),
            compiler_params=pltpu.CompilerParams(
                dimension_semantics=("parallel", "parallel"),
                vmem_limit_bytes=32 * 1024 * 1024,
            ),
        )(p)

    return jnp.transpose(out, (0, 3, 1, 2))           # NHWC -> NCHW


# ---------------------------------------------------------------------------
# Pure-JAX reference of the PyTorch forward (NCHW)
# ---------------------------------------------------------------------------

def _reference(x_nchw, with_conv, weight=None, bias=None):
    if with_conv:
        xp = jnp.pad(x_nchw, ((0, 0), (0, 0), (0, 1), (0, 1)))
        y = jax.lax.conv_general_dilated(
            xp, weight, window_strides=(2, 2), padding="VALID",
            dimension_numbers=("NCHW", "OIHW", "NCHW"),
            precision=jax.lax.Precision.HIGHEST,
        )
        return y + bias.reshape(1, -1, 1, 1)
    else:
        s = jax.lax.reduce_window(
            x_nchw, 0.0, jax.lax.add, (1, 1, 2, 2), (1, 1, 2, 2), "VALID")
        return s / 4.0


if __name__ == "__main__":
    key = jax.random.PRNGKey(0)
    kx, kw, kb = jax.random.split(key, 3)

    N, C, H, W = 2, 4, 16, 16
    x = jax.random.normal(kx, (N, C, H, W), dtype=jnp.float32)

    # Deterministic Conv2d(C, C, 3) parameter init (kaiming-uniform-like bound).
    fan_in = C * 3 * 3
    bound = 1.0 / (fan_in ** 0.5)
    weight = jax.random.uniform(kw, (C, C, 3, 3), jnp.float32, -bound, bound)
    bias = jax.random.uniform(kb, (C,), jnp.float32, -bound, bound)

    # with_conv = True path: explicit row tiling (grid (N, 2)) and auto-pick.
    y_conv = jax.block_until_ready(downsample(x, True, weight, bias, row_tile=4))
    ref_conv = _reference(x, True, weight, bias)
    assert y_conv.shape == (N, C, H // 2, W // 2)
    assert jnp.allclose(y_conv, ref_conv, atol=1e-4, rtol=1e-4)

    y_conv_auto = jax.block_until_ready(downsample(x, True, weight, bias))
    assert jnp.allclose(y_conv_auto, ref_conv, atol=1e-4, rtol=1e-4)

    # with_conv = False path (avg_pool2d), tiled over output rows.
    y_pool = jax.block_until_ready(downsample(x, False, row_tile=2))
    ref_pool = _reference(x, False)
    assert y_pool.shape == (N, C, H // 2, W // 2)
    assert jnp.allclose(y_pool, ref_pool, atol=1e-5, rtol=1e-5)

    print("KERNEL_OK")
</pallas_src>

<mosaic_0001>
module attributes {stable_mosaic.version = 11 : i64} {
  func.func @_conv_down_kernel(%arg0: i32, %arg1: i32, %arg2: memref<1x4x9x16xf32, #tpu.memory_space<vmem>>, %arg3: memref<1x1x9x16xf32, #tpu.memory_space<vmem>>, %arg4: memref<36x4xf32, #tpu.memory_space<vmem>>, %arg5: memref<1x4xf32, #tpu.memory_space<vmem>>, %arg6: memref<1x4x8x4xf32, #tpu.memory_space<vmem>>) attributes {dimension_semantics = [#tpu.dimension_semantics<parallel>, #tpu.dimension_semantics<parallel>], iteration_bounds = array<i64: 2, 2>, scalar_prefetch = 0 : i64, scratch_operands = 0 : i64, tpu.core_type = #tpu.core_type<tc>, window_params = [{transform_indices = @transform_0, window_bounds = array<i64: 1, 4, 9, 16>}, {transform_indices = @transform_1, window_bounds = array<i64: 1, 1, 9, 16>}, {pipeline_mode = #tpu.pipeline_mode<synchronous>, transform_indices = @transform_2, window_bounds = array<i64: 36, 4>}, {pipeline_mode = #tpu.pipeline_mode<synchronous>, transform_indices = @transform_3, window_bounds = array<i64: 1, 4>}, {transform_indices = @transform_4, window_bounds = array<i64: 1, 4, 8, 4>}]} {
    %c0 = arith.constant 0 : index
    %c0_0 = arith.constant 0 : index
    %c0_1 = arith.constant 0 : index
    %c0_2 = arith.constant 0 : index
    %0 = vector.load %arg2[%c0, %c0_0, %c0_1, %c0_2] : memref<1x4x9x16xf32, #tpu.memory_space<vmem>>, vector<1x4x9x16xf32>
    %1 = vector.shape_cast %0 : vector<1x4x9x16xf32> to vector<4x9x16xf32>
    %c0_3 = arith.constant 0 : index
    %c0_4 = arith.constant 0 : index
    %c0_5 = arith.constant 0 : index
    %c0_6 = arith.constant 0 : index
    %2 = vector.load %arg3[%c0_3, %c0_4, %c0_5, %c0_6] : memref<1x1x9x16xf32, #tpu.memory_space<vmem>>, vector<1x1x9x16xf32>
    %3 = vector.shape_cast %2 : vector<1x1x9x16xf32> to vector<1x9x16xf32>
    %4 = tpu.concatenate %1, %3 in 0 : vector<4x9x16xf32>, vector<1x9x16xf32> -> vector<5x9x16xf32>
    %5 = vector.extract_strided_slice %4 {offsets = [0, 0, 0], sizes = [4, 8, 8], strides = [1, 1, 1]} : vector<5x9x16xf32> to vector<4x8x8xf32>
    %6 = vector.extract_strided_slice %4 {offsets = [0, 1, 0], sizes = [4, 8, 4], strides = [1, 1, 1]} : vector<5x9x16xf32> to vector<4x8x4xf32>
    %7 = vector.extract_strided_slice %4 {offsets = [0, 0, 8], sizes = [4, 8, 8], strides = [1, 1, 1]} : vector<5x9x16xf32> to vector<4x8x8xf32>
    %8 = vector.extract_strided_slice %4 {offsets = [0, 1, 8], sizes = [4, 8, 4], strides = [1, 1, 1]} : vector<5x9x16xf32> to vector<4x8x4xf32>
    %9 = vector.extract_strided_slice %4 {offsets = [1, 0, 0], sizes = [4, 8, 8], strides = [1, 1, 1]} : vector<5x9x16xf32> to vector<4x8x8xf32>
    %10 = vector.extract_strided_slice %4 {offsets = [1, 1, 0], sizes = [4, 8, 4], strides = [1, 1, 1]} : vector<5x9x16xf32> to vector<4x8x4xf32>
    %11 = tpu.concatenate %5, %6, %7, %8, %9, %10 in 2 : vector<4x8x8xf32>, vector<4x8x4xf32>, vector<4x8x8xf32>, vector<4x8x4xf32>, vector<4x8x8xf32>, vector<4x8x4xf32> -> vector<4x8x36xf32>
    %12 = vector.shape_cast %11 : vector<4x8x36xf32> to vector<32x36xf32>
    %c0_7 = arith.constant 0 : index
    %c0_8 = arith.constant 0 : index
    %13 = vector.load %arg4[%c0_7, %c0_8] : memref<36x4xf32, #tpu.memory_space<vmem>>, vector<36x4xf32>
    %cst = arith.constant dense<0.000000e+00> : vector<32x4xf32>
    %14 = tpu.matmul %12, %13, %cst {dimension_numbers = #tpu.dot_dimension_numbers<[1], [0], [0], [1], [0, 0, 1, 1], [], []>, precision = #tpu.contract_precision<fp32>} : vector<32x36xf32>, vector<36x4xf32>, vector<32x4xf32> -> vector<32x4xf32>
    %c0_9 = arith.constant 0 : index
    %c0_10 = arith.constant 0 : index
    %15 = vector.load %arg5[%c0_9, %c0_10] : memref<1x4xf32, #tpu.memory_space<vmem>>, vector<1x4xf32>
    %16 = vector.broadcast %15 : vector<1x4xf32> to vector<32x4xf32>
    %17 = arith.addf %14, %16 : vector<32x4xf32>
    %18 = vector.shape_cast %17 : vector<32x4xf32> to vector<1x4x8x4xf32>
    %c0_11 = arith.constant 0 : index
    %c0_12 = arith.constant 0 : index
    %c0_13 = arith.constant 0 : index
    %c0_14 = arith.constant 0 : index
    %19 = vector.load %arg6[%c0_11, %c0_12, %c0_13, %c0_14] : memref<1x4x8x4xf32, #tpu.memory_space<vmem>>, vector<1x4x8x4xf32>
    tpu.vector_store %arg6[%c0_11, %c0_12, %c0_13, %c0_14], %18 {strides = array<i32>} : memref<1x4x8x4xf32, #tpu.memory_space<vmem>>, vector<1x4x8x4xf32>,
    return
  }
  func.func @transform_0(%arg0: i32, %arg1: i32) -> (i32, i32, i32, i32) {
    %c0_i32 = arith.constant 0 : i32
    %c0_i32_0 = arith.constant 0 : i32
    %c0_i32_1 = arith.constant 0 : i32
    return %arg0, %arg1, %c0_i32, %c0_i32_0 : i32, i32, i32, i32
  }
  func.func @transform_1(%arg0: i32, %arg1: i32) -> (i32, i32, i32, i32) {
    %c1_i32 = arith.constant 1 : i32
    %0 = arith.addi %arg1, %c1_i32 : i32
    %c4_i32 = arith.constant 4 : i32
    %1 = arith.muli %0, %c4_i32 : i32
    %c0_i32 = arith.constant 0 : i32
    %c0_i32_0 = arith.constant 0 : i32
    %c0_i32_1 = arith.constant 0 : i32
    return %arg0, %1, %c0_i32, %c0_i32_0 : i32, i32, i32, i32
  }
  func.func @transform_2(%arg0: i32, %arg1: i32) -> (i32, i32) {
    %c0_i32 = arith.constant 0 : i32
    %c0_i32_0 = arith.constant 0 : i32
    %c0_i32_1 = arith.constant 0 : i32
    return %c0_i32, %c0_i32_0 : i32, i32
  }
  func.func @transform_3(%arg0: i32, %arg1: i32) -> (i32, i32) {
    %c0_i32 = arith.constant 0 : i32
    %c0_i32_0 = arith.constant 0 : i32
    %c0_i32_1 = arith.constant 0 : i32
    return %c0_i32, %c0_i32_0 : i32, i32
  }
  func.func @transform_4(%arg0: i32, %arg1: i32) -> (i32, i32, i32, i32) {
    %c0_i32 = arith.constant 0 : i32
    %c0_i32_0 = arith.constant 0 : i32
    %c0_i32_1 = arith.constant 0 : i32
    return %arg0, %arg1, %c0_i32, %c0_i32_0 : i32, i32, i32, i32
  }
}

</mosaic_0001>

<llo_original>
// kernel: downsample.1
$region0: #{downsample.1}
  #allocation0 [shape = 'u32[]', space=smem, size = 0x4, offset = 0x4, fixed_abs, tag = 'smem constant byte address 0x4 - core index']
  #allocation1 [shape = 'u32[144,128]{1,0:T(1,128)}', space=vmem, size = 0x12000, scoped, tag = 'internal scratch']
  %s0 = inlined_call_operand.vmem [shape: f32[2,9,9,16], index: 0, kind: input, shape index: {}, may-alias: {0,1}]
  %s1 = inlined_call_operand.vmem [shape: f32[2,9,9,16], index: 1, kind: input, shape index: {}, may-alias: {0,1}]
  %s2 = inlined_call_operand.vmem [shape: f32[36,4], index: 2, kind: input, shape index: {}]
  %s3 = inlined_call_operand.vmem [shape: f32[1,4], index: 3, kind: input, shape index: {}]
  %s4 = inlined_call_operand.vmem [shape: f32[2,8,8,4], index: 4, kind: output, shape index: {}]
  %s5 = sld [smem:[#allocation0]]
  $region49: #{downsample.1} parent=0
    _
  %s7 = ssub.s32 1, %s5
  %s8 = scalar_select 0, %s7, %s5
  loop: start=0, step=1, limit=6
  $region2: #{downsample.1} parent=0 // loop_pre_header
    _
  $region3: #{downsample.1} parent=0 // loop_header
    %s10 = sphi 0, %s14
    %p11 = scmp.ge.s32.totalorder %s10, 6
    %s17 = sphi 0, %s29
    %s18 = sphi 0, %s25
    %s19 = sphi 0, %s17
    %s20 = sphi 0, %s18
    %s21 = sphi 0, %s19
    %s22 = sphi 0, %s20
    %s34 = sphi 0, %s36
    %s37 = sphi 0, %s34
    %s38 = sphi 0, %s37
    %s54 = sphi 0, %s38
    %s66 = sphi 0, %s68
    %s69 = sphi 0, %s66
    %s70 = sphi 0, %s69
    %s86 = sphi 0, %s70
    %s90 = sphi 0, %s90
    %s92 = sphi 0, %s90
    %s93 = sphi 0, %s92
    %s107 = sphi 0, %s93
    %s111 = sphi 0, %s111
    %s113 = sphi 0, %s111
    %s114 = sphi 0, %s113
    %s128 = sphi 0, %s114
    %s136 = sphi 0, %s138
    %s139 = sphi 0, %s136
    %s140 = sphi 0, %s139
    %s156 = sphi 0, %s140
  $region4: #{downsample.1} parent=0 // loop_header_branch
    %13 = sbr.rel (%p11) target = $region8
  $region5: #{downsample.1} parent=0 // loop_body
    %s15 = ssub.s32 %s10, 1
    %s16 = ssub.s32 %s10, 2
    %s23 = sadd.s32 1, %s18
    %p24 = scmp.ge.s32.totalorder %s23, 2
    %s25 = scalar_select %p24, 0, %s23
    %s26 = sadd.s32 1, %s17
    %s27 = scalar_select %p24, %s26, %s17
    %p28 = scmp.ge.s32.totalorder %s27, 2
    %s29 = scalar_select %p28, 0, %s27
    %s30 = ssub.s32 %s17, %s29
    %s31 = ssub.s32 %s18, %s25
    %s32 = sor.u32 %s30, %s31
    %p33 = scmp.eq.s32.totalorder %s32, 0
    %s35 = sadd.s32 %s34, 1
    %s36 = scalar_select %p33, %s34, %s35
    %p39 = pneg %p33
    %p40 = scmp.eq.s32.totalorder %s10, 3
    %p41 = por %p39, %p40
    %p42 = scmp.ne.s32.totalorder %s34, %s37
    %p43 = scmp.eq.s32.totalorder %s10, 0
    %p44 = por %p42, %p43
    %p45 = scmp.ne.s32.totalorder %s34, %s37
    %p46 = scmp.eq.s32.totalorder %s15, 3
    %p47 = por %p45, %p46
    %p48 = scmp.ne.s32.totalorder %s37, %s38
    %p49 = scmp.eq.s32.totalorder %s15, 0
    %p50 = por %p48, %p49
    %p51 = scmp.ne.s32.totalorder %s37, %s38
    %p52 = scmp.eq.s32.totalorder %s16, 3
    %p53 = por %p51, %p52
    %p55 = scmp.ne.s32.totalorder %s38, %s54
    %p56 = scmp.eq.s32.totalorder %s16, 0
    %p57 = por %p55, %p56
    %s58 = sadd.s32 %s18, 1
    %s59 = smul.u32 %s58, 4
    %s60 = sadd.s32 %s25, 1
    %s61 = smul.u32 %s60, 4
    %s62 = ssub.s32 %s17, %s29
    %s63 = ssub.s32 %s59, %s61
    %s64 = sor.u32 %s62, %s63
    %p65 = scmp.eq.s32.totalorder %s64, 0
    %s67 = sadd.s32 %s66, 1
    %s68 = scalar_select %p65, %s66, %s67
    %p71 = pneg %p65
    %p72 = scmp.eq.s32.totalorder %s10, 3
    %p73 = por %p71, %p72
    %p74 = scmp.ne.s32.totalorder %s66, %s69
    %p75 = scmp.eq.s32.totalorder %s10, 0
    %p76 = por %p74, %p75
    %p77 = scmp.ne.s32.totalorder %s66, %s69
    %p78 = scmp.eq.s32.totalorder %s15, 3
    %p79 = por %p77, %p78
    %p80 = scmp.ne.s32.totalorder %s69, %s70
    %p81 = scmp.eq.s32.totalorder %s15, 0
    %p82 = por %p80, %p81
    %p83 = scmp.ne.s32.totalorder %s69, %s70
    %p84 = scmp.eq.s32.totalorder %s16, 3
    %p85 = por %p83, %p84
    %p87 = scmp.ne.s32.totalorder %s70, %s86
    %p88 = scmp.eq.s32.totalorder %s16, 0
    %p89 = por %p87, %p88
    %s91 = sadd.s32 %s90, 1
    %p94 = scmp.eq.s32.totalorder %s10, 3
    %p95 = scmp.ne.s32.totalorder %s90, %s92
    %p96 = scmp.eq.s32.totalorder %s10, 0
    %p97 = por %p95, %p96
    %p98 = scmp.ne.s32.totalorder %s90, %s92
    %p99 = scmp.eq.s32.totalorder %s15, 3
    %p100 = por %p98, %p99
    %p101 = scmp.ne.s32.totalorder %s92, %s93
    %p102 = scmp.eq.s32.totalorder %s15, 0
    %p103 = por %p101, %p102
    %p104 = scmp.ne.s32.totalorder %s92, %s93
    %p105 = scmp.eq.s32.totalorder %s16, 3
    %p106 = por %p104, %p105
    %p108 = scmp.ne.s32.totalorder %s93, %s107
    %p109 = scmp.eq.s32.totalorder %s16, 0
    %p110 = por %p108, %p109
    %s112 = sadd.s32 %s111, 1
    %p115 = scmp.eq.s32.totalorder %s10, 3
    %p116 = scmp.ne.s32.totalorder %s111, %s113
    %p117 = scmp.eq.s32.totalorder %s10, 0
    %p118 = por %p116, %p117
    %p119 = scmp.ne.s32.totalorder %s111, %s113
    %p120 = scmp.eq.s32.totalorder %s15, 3
    %p121 = por %p119, %p120
    %p122 = scmp.ne.s32.totalorder %s113, %s114
    %p123 = scmp.eq.s32.totalorder %s15, 0
    %p124 = por %p122, %p123
    %p125 = scmp.ne.s32.totalorder %s113, %s114
    %p126 = scmp.eq.s32.totalorder %s16, 3
    %p127 = por %p125, %p126
    %p129 = scmp.ne.s32.totalorder %s114, %s128
    %p130 = scmp.eq.s32.totalorder %s16, 0
    %p131 = por %p129, %p130
    %s132 = ssub.s32 %s17, %s29
    %s133 = ssub.s32 %s18, %s25
    %s134 = sor.u32 %s132, %s133
    %p135 = scmp.eq.s32.totalorder %s134, 0
    %s137 = sadd.s32 %s136, 1
    %s138 = scalar_select %p135, %s136, %s137
    %p141 = pneg %p135
    %p142 = scmp.eq.s32.totalorder %s10, 3
    %p143 = por %p141, %p142
    %p144 = scmp.ne.s32.totalorder %s136, %s139
    %p145 = scmp.eq.s32.totalorder %s10, 0
    %p146 = por %p144, %p145
    %p147 = scmp.ne.s32.totalorder %s136, %s139
    %p148 = scmp.eq.s32.totalorder %s15, 3
    %p149 = por %p147, %p148
    %p150 = scmp.ne.s32.totalorder %s139, %s140
    %p151 = scmp.eq.s32.totalorder %s15, 0
    %p152 = por %p150, %p151
    %p153 = scmp.ne.s32.totalorder %s139, %s140
    %p154 = scmp.eq.s32.totalorder %s16, 3
    %p155 = por %p153, %p154
    %p157 = scmp.ne.s32.totalorder %s140, %s156
    %p158 = scmp.eq.s32.totalorder %s16, 0
    %p159 = por %p157, %p158
    %p160 = scmp.le.s32.totalorder 1, %s10
    %p161 = scmp.lt.s32.totalorder %s10, 5
    %p162 = pnand %p160, %p161
    %p163 = pneg %p162
    // Predicated region
    $region9: #{downsample.1} parent=5 // pred_check
      _
    $region10: #{downsample.1} parent=5 // pred_check_branch
      %165 = sbr.rel (%p162) target = $region12
    $region11: #{downsample.1} parent=5 // pred_region
      %s166 = ssub.s32 %s10, 1
      // Predicated region
      $region13: #{downsample.1} parent=11 // pred_check
        %p167 = pneg %p103
      $region14: #{downsample.1} parent=11 // pred_check_branch
        %169 = sbr.rel (%p167) target = $region16
      $region15: #{downsample.1} parent=11 // pred_region
        _
      $region16: #{downsample.1} parent=11 // pred_fallthru
        _
      // Predicated region
      $region17: #{downsample.1} parent=11 // pred_check
        %p170 = pneg %p124
      $region18: #{downsample.1} parent=11 // pred_check_branch
        %172 = sbr.rel (%p170) target = $region20
      $region19: #{downsample.1} parent=11 // pred_region
        _
      $region20: #{downsample.1} parent=11 // pred_fallthru
        _
    $region12: #{downsample.1} parent=5 // pred_fallthru
      _
    %p173 = scmp.lt.s32.totalorder %s10, 4
    // Predicated region
    $region21: #{downsample.1} parent=5 // pred_check
      %p174 = pneg %p173
    $region22: #{downsample.1} parent=5 // pred_check_branch
      %176 = sbr.rel (%p174) target = $region24
    $region23: #{downsample.1} parent=5 // pred_region
      // Predicated region
      $region25: #{downsample.1} parent=23 // pred_check
        %p177 = pneg %p44
      $region26: #{downsample.1} parent=23 // pred_check_branch
        %179 = sbr.rel (%p177) target = $region28
      $region27: #{downsample.1} parent=23 // pred_region
        %s180 = smul.u32 4, %s18
        %s181 = ssub.s32 9, %s180
        %p182 = scmp.lt.s32.totalorder %s181, 4
        %s183 = scalar_select %p182, %s181, 4
        %s184 = smul.u32 128, %s183
        %s185 = smul.u32 %s184, 2
        %p186 = scmp.lt.s32.totalorder %s17, 1
        %s187 = scalar_select %p186, %s17, 1
        %p188 = scmp.lt.s32.totalorder %s180, 8
        %s189 = scalar_select %p188, %s180, 8
        %s190 = smul.addr %s189, 2
        %s191 = smul.addr %s187, 18
        %s192 = sadd.s32 %s190, %s191
        %s193 = smul.addr %s192, 8
        %s194 = scalar_lea.vmem %s0, %s193
        %s195 = smul.u32 4, %s18
        %s196 = ssub.s32 9, %s195
        %p197 = scmp.lt.s32.totalorder %s196, 4
        %s198 = scalar_select %p197, %s196, 4
        %s199 = smul.u32 128, %s198
        %s200 = smul.u32 %s199, 2
      $region28: #{downsample.1} parent=23 // pred_fallthru
        _
      // Predicated region
      $region29: #{downsample.1} parent=23 // pred_check
        %p201 = pneg %p76
      $region30: #{downsample.1} parent=23 // pred_check_branch
        %203 = sbr.rel (%p201) target = $region32
      $region31: #{downsample.1} parent=23 // pred_region
        %s204 = sadd.s32 %s18, 1
        %s205 = smul.u32 %s204, 4
        %p206 = scmp.lt.s32.totalorder %s17, 1
        %s207 = scalar_select %p206, %s17, 1
        %p208 = scmp.lt.s32.totalorder %s205, 8
        %s209 = scalar_select %p208, %s205, 8
        %s210 = smul.addr %s209, 2
        %s211 = smul.addr %s207, 18
        %s212 = sadd.s32 %s210, %s211
        %s213 = smul.addr %s212, 8
        %s214 = scalar_lea.vmem %s1, %s213
        %s215 = sadd.s32 %s18, 1
        %s216 = smul.u32 %s215, 4
      $region32: #{downsample.1} parent=23 // pred_fallthru
        _
    $region24: #{downsample.1} parent=5 // pred_fallthru
      _
    %p217 = scmp.le.s32.totalorder 1, %s10
    %p218 = scmp.lt.s32.totalorder %s10, 5
    %p219 = pnand %p217, %p218
    %p220 = pneg %p219
    // Predicated region
    $region33: #{downsample.1} parent=5 // pred_check
      _
    $region34: #{downsample.1} parent=5 // pred_check_branch
      %222 = sbr.rel (%p219) target = $region36
    $region35: #{downsample.1} parent=5 // pred_region
      %s223 = ssub.s32 %s10, 1
      %s224 = smul.u32 4, %s20
      %s225 = ssub.s32 9, %s224
      %p226 = scmp.lt.s32.totalorder %s225, 4
      %s227 = scalar_select %p226, %s225, 4
      %s228 = smul.u32 128, %s227
      %s229 = smul.u32 %s228, 2
      %p230 = scmp.lt.s32.totalorder %s19, 1
      %s231 = scalar_select %p230, %s19, 1
      %p232 = scmp.lt.s32.totalorder %s224, 8
      %s233 = scalar_select %p232, %s224, 8
      %s234 = smul.addr %s233, 2
      %s235 = smul.addr %s231, 18
      %s236 = sadd.s32 %s234, %s235
      %s237 = smul.addr %s236, 8
      %s238 = scalar_lea.vmem %s0, %s237
      %p239 = pneg %p50
      %p240 = pneg %p47
      %s241 = sadd.s32 %s20, 1
      %s242 = smul.u32 %s241, 4
      %p243 = scmp.lt.s32.totalorder %s19, 1
      %s244 = scalar_select %p243, %s19, 1
      %p245 = scmp.lt.s32.totalorder %s242, 8
      %s246 = scalar_select %p245, %s242, 8
      %s247 = smul.addr %s246, 2
      %s248 = smul.addr %s244, 18
      %s249 = sadd.s32 %s247, %s248
      %s250 = smul.addr %s249, 8
      %s251 = scalar_lea.vmem %s1, %s250
      %p252 = pneg %p82
      %p253 = pneg %p79
      %p254 = pneg %p103
      %p255 = pneg %p100
      %p256 = pneg %p124
      %p257 = pneg %p121
      %p258 = pneg %p152
      %p259 = pneg %p149
      %s260 = smul.u32 4, %s20
      %p261 = scmp.lt.s32.totalorder %s19, 1
      %s262 = scalar_select %p261, %s19, 1
      %p263 = scmp.lt.s32.totalorder %s260, 7
      %s264 = scalar_select %p263, %s260, 7
      %s265 = smul.addr %s262, 8
      %s266 = sadd.s32 %s264, %s265
      %s267 = smul.addr %s266, 8
      %s268 = scalar_lea.vmem %s4, %s267
      %s269 = smul.u32 4, %s20
      %s270 = ssub.s32 9, %s269
      %p271 = scmp.lt.s32.totalorder %s270, 4
      %s272 = scalar_select %p271, %s270, 4
      %s273 = smul.u32 128, %s272
      %s274 = smul.u32 %s273, 2
      %p275 = scmp.lt.s32.totalorder %s19, 1
      %s276 = scalar_select %p275, %s19, 1
      %p277 = scmp.lt.s32.totalorder %s269, 8
      %s278 = scalar_select %p277, %s269, 8
      %s279 = smul.addr %s278, 2
      %s280 = smul.addr %s276, 18
      %s281 = sadd.s32 %s279, %s280
      %s282 = smul.addr %s281, 8
      %s283 = scalar_lea.vmem %s0, %s282
      %s284 = smul.u32 4, %s20
      %s285 = ssub.s32 9, %s284
      %p286 = scmp.lt.s32.totalorder %s285, 4
      %s287 = scalar_select %p286, %s285, 4
      %s288 = smul.u32 128, %s287
      %s289 = smul.u32 %s288, 2
      %s290 = sadd.s32 %s20, 1
      %s291 = smul.u32 %s290, 4
      %p292 = scmp.lt.s32.totalorder %s19, 1
      %s293 = scalar_select %p292, %s19, 1
      %p294 = scmp.lt.s32.totalorder %s291, 8
      %s295 = scalar_select %p294, %s291, 8
      %s296 = smul.addr %s295, 2
      %s297 = smul.addr %s293, 18
      %s298 = sadd.s32 %s296, %s297
      %s299 = smul.addr %s298, 8
      %s300 = scalar_lea.vmem %s1, %s299
      %s301 = sadd.s32 %s20, 1
      %s302 = smul.u32 %s301, 4
      %s303 = smul.u32 4, %s20
      %p304 = scmp.lt.s32.totalorder %s19, 1
      %s305 = scalar_select %p304, %s19, 1
      %p306 = scmp.lt.s32.totalorder %s303, 7
      %s307 = scalar_select %p306, %s303, 7
      %s308 = smul.addr %s305, 8
      %s309 = sadd.s32 %s307, %s308
      %s310 = smul.addr %s309, 8
      %s311 = scalar_lea.vmem %s4, %s310
      %s312 = smul.u32 4, %s20
      %v313 = vld [vmem:[%s283] sm:$0xff]
      %v314 = vld [vmem:[%s283 + $0x8] sm:$0x1]
      %v315 = vld [vmem:[%s283 + $0x10] sm:$0xff]
      %v316 = vld [vmem:[%s283 + $0x18] sm:$0x1]
      %v317 = vld [vmem:[%s283 + $0x20] sm:$0xff]
      %v318 = vld [vmem:[%s283 + $0x28] sm:$0x1]
      %v319 = vld [vmem:[%s283 + $0x30] sm:$0xff]
      %v320 = vld [vmem:[%s283 + $0x38] sm:$0x1]
      %v321 = vld [vmem:[%s300] sm:$0xff]
      %v322 = vld [vmem:[%s300 + $0x8] sm:$0x1]
      %vm331 = vcmask 1046528
      %v332 = vrot.slane %v313, 1
      %v333 = vrot.slane %v314, 1
      %v334 = vsel %vm331, %v332, %v333
      %v335 = vrot.slane %v315, 1
      %v336 = vrot.slane %v316, 1
      %v337 = vsel %vm331, %v335, %v336
      %v338 = vrot.slane %v317, 1
      %v339 = vrot.slane %v318, 1
      %v340 = vsel %vm331, %v338, %v339
      %v341 = vrot.slane %v319, 1
      %v342 = vrot.slane %v320, 1
      %v343 = vsel %vm331, %v341, %v342
      %344 = vrot.lane.b32.xlu0 %v334, 8
      %v345 = vpop.permute.xlu0 %344
      %346 = vrot.lane.b32.xlu0 %v337, 8
      %v347 = vpop.permute.xlu0 %346
      %348 = vrot.lane.b32.xlu0 %v340, 8
      %v349 = vpop.permute.xlu0 %348
      %350 = vrot.lane.b32.xlu0 %v343, 8
      %v351 = vpop.permute.xlu0 %350
      %356 = vrot.lane.b32.xlu0 %v313, 4
      %v357 = vpop.permute.xlu0 %356
      %358 = vrot.lane.b32.xlu0 %v315, 4
      %v359 = vpop.permute.xlu0 %358
      %360 = vrot.lane.b32.xlu0 %v317, 4
      %v361 = vpop.permute.xlu0 %360
      %362 = vrot.lane.b32.xlu0 %v319, 4
      %v363 = vpop.permute.xlu0 %362
      %368 = vrot.lane.b32.xlu0 %v334, 12
      %v369 = vpop.permute.xlu0 %368
      %370 = vrot.lane.b32.xlu0 %v337, 12
      %v371 = vpop.permute.xlu0 %370
      %372 = vrot.lane.b32.xlu0 %v340, 12
      %v373 = vpop.permute.xlu0 %372
      %374 = vrot.lane.b32.xlu0 %v343, 12
      %v375 = vpop.permute.xlu0 %374
      %381 = vrot.lane.b32.xlu0 %v315, 24
      %v382 = vpop.permute.xlu0 %381
      %383 = vrot.lane.b32.xlu0 %v317, 24
      %v384 = vpop.permute.xlu0 %383
      %385 = vrot.lane.b32.xlu0 %v319, 24
      %v386 = vpop.permute.xlu0 %385
      %387 = vrot.lane.b32.xlu0 %v321, 24
      %v388 = vpop.permute.xlu0 %387
      %v394 = vrot.slane %v321, 1
      %v395 = vrot.slane %v322, 1
      %v396 = vsel %vm331, %v394, %v395
      %397 = vrot.lane.b32.xlu0 %v337, 32
      %v398 = vpop.permute.xlu0 %397
      %399 = vrot.lane.b32.xlu0 %v340, 32
      %v400 = vpop.permute.xlu0 %399
      %401 = vrot.lane.b32.xlu0 %v343, 32
      %v402 = vpop.permute.xlu0 %401
      %403 = vrot.lane.b32.xlu0 %v396, 32
      %v404 = vpop.permute.xlu0 %403
      %vm409 = vcmask 64512
      %v410 = vsel %vm409, %v313, %v345
      %v411 = vsel %vm409, %v315, %v347
      %v412 = vsel %vm409, %v317, %v349
      %v413 = vsel %vm409, %v319, %v351
      %vm414 = vcmask 97280
      %v415 = vsel %vm414, %v410, %v357
      %v416 = vsel %vm414, %v411, %v359
      %v417 = vsel %vm414, %v412, %v361
      %v418 = vsel %vm414, %v413, %v363
      %vm419 = vcmask 162816
      %v420 = vsel %vm419, %v415, %v369
      %v421 = vsel %vm419, %v416, %v371
      %v422 = vsel %vm419, %v417, %v373
      %v423 = vsel %vm419, %v418, %v375
      %vm424 = vcmask 195584
      %v425 = vsel %vm424, %v420, %v382
      %v426 = vsel %vm424, %v421, %v384
      %v427 = vsel %vm424, %v422, %v386
      %v428 = vsel %vm424, %v423, %v388
      %vm429 = vcmask 261120
      %v430 = vsel %vm429, %v425, %v398
      %v431 = vsel %vm429, %v426, %v400
      %v432 = vsel %vm429, %v427, %v402
      %v433 = vsel %vm429, %v428, %v404
      %v434 = vld [vmem:[%s2] sm:$0xff]
      %v435 = vld [vmem:[%s2 + $0x8] sm:$0xff]
      %v436 = vld [vmem:[%s2 + $0x10] sm:$0xff]
      %v437 = vld [vmem:[%s2 + $0x18] sm:$0xff]
      %v438 = vld [vmem:[%s2 + $0x20] sm:$0xf]
      %v439 = vld [vmem:[%s3] sm:$0x1]
      %v441 = vlaneseq
      %v442 = vshrl.u32 %v441, 7
      %v443 = vsub.s32 0, %v442
      %v444 = vrot.slane %v439, %v443
      %vm446 = vcmask 293888
      %v448 = vsel %vm446, %v430, 0
      %v451 = vsel %vm446, %v431, 0
      %v454 = vsel %vm446, %v432, 0
      %v457 = vsel %vm446, %v433, 0
      %vm459 = vcmask 1043456
      %v461 = vsel %vm459, %v438, 0
      %463 = vmatprep.subr.mxu0 0.0
      %464 = vmatpush1.msra.mxu0 0.0
      %465 = vmatprep.subr.mxu0 0.0
      %466 = vmatpush1.msra.mxu0 0.0
      %467 = vmatprep.subr.mxu0 0.0
      %468 = vmatpush1.msra.mxu0 0.0
      %469 = vmatprep.subr.mxu0 0.0
      %470 = vmatpush1.msra.mxu0 0.0
      %471 = vmatprep.subr.mxu0 0.0
      %472 = vmatpush1.msra.mxu0 0.0
      %473 = vmatprep.subr.mxu0 0.0
      %474 = vmatpush1.msra.mxu0 0.0
      %475 = vmatprep.subr.mxu0 0.0
      %476 = vmatpush1.msra.mxu0 0.0
      %477 = vmatprep.subr.mxu0 0.0
      %478 = vmatpush1.msra.mxu0 0.0
      %479 = vmatprep.subr.mxu0 0.0
      %480 = vmatpush1.msra.mxu0 0.0
      %481 = vmatprep.subr.mxu0 0.0
      %482 = vmatpush1.msra.mxu0 0.0
      %483 = vmatprep.subr.mxu0 0.0
      %484 = vmatpush1.msra.mxu0 0.0
      %485 = vmatprep.subr.mxu0 0.0
      %v486 = vand.u32 %v461, 4294901760
      %487 = vmatpush1.msra.mxu0 %v486
      %488 = vmatprep.subr.mxu0 0.0
      %v489 = vand.u32 %v437, 4294901760
      %490 = vmatpush1.msra.mxu0 %v489
      %491 = vmatprep.subr.mxu0 0.0
      %v492 = vand.u32 %v436, 4294901760
      %493 = vmatpush1.msra.mxu0 %v492
      %494 = vmatprep.subr.mxu0 0.0
      %v495 = vand.u32 %v435, 4294901760
      %496 = vmatpush1.msra.mxu0 %v495
      %497 = vmatprep.subr.mxu0 0.0
      %v498 = vand.u32 %v434, 4294901760
      %499 = vmatpush1.msra.mxu0 %v498
      %500 = vmatprep.subr.mxu0 0.0
      %501 = vmatpush2.msra.mxu0 0.0
      %502 = vmatprep.subr.mxu0 0.0
      %503 = vmatpush2.msra.mxu0 0.0
      %504 = vmatprep.subr.mxu0 0.0
      %505 = vmatpush2.msra.mxu0 0.0
      %506 = vmatprep.subr.mxu0 0.0
      %507 = vmatpush2.msra.mxu0 0.0
      %508 = vmatprep.subr.mxu0 0.0
      %509 = vmatpush2.msra.mxu0 0.0
      %510 = vmatprep.subr.mxu0 0.0
      %511 = vmatpush2.msra.mxu0 0.0
      %512 = vmatprep.subr.mxu0 0.0
      %513 = vmatpush2.msra.mxu0 0.0
      %514 = vmatprep.subr.mxu0 0.0
      %515 = vmatpush2.msra.mxu0 0.0
      %516 = vmatprep.subr.mxu0 0.0
      %517 = vmatpush2.msra.mxu0 0.0
      %518 = vmatprep.subr.mxu0 0.0
      %519 = vmatpush2.msra.mxu0 0.0
      %520 = vmatprep.subr.mxu0 0.0
      %521 = vmatpush2.msra.mxu0 0.0
      %522 = vmatprep.subr.mxu0 0.0
      %523 = vmatpush2.msra.mxu0 0.0
      %524 = vmatprep.subr.mxu0 0.0
      %525 = vmatpush2.msra.mxu0 0.0
      %526 = vmatprep.subr.mxu0 0.0
      %527 = vmatpush2.msra.mxu0 0.0
      %528 = vmatprep.subr.mxu0 0.0
      %529 = vmatpush2.msra.mxu0 0.0
      %530 = vmatprep.subr.mxu0 0.0
      %531 = vmatpush2.msra.mxu0 0.0
      %532 = vmatprep.mubr.f32.mxu0 0.0
      %v533 = vand.u32 %v448, 4294901760
      %v534 = vsub.f32 %v448, %v533
      %v535 = vand.u32 %v534, 4294901760
      %v536 = vsub.f32 %v534, %v535
      %v537 = vand.u32 %v536, 4294901760
      %538 = vmatmul.mubr.f32.gmra.mxu0 %v537
      %v539 = vpop.f32.mrf.mxu0
      %v540 = vadd.f32 %v444, %v539
      %v541 = vpop.f32.mrf.mxu0
      %542 = vmatprep.mubr.f32.mxu0 0.0
      %v543 = vand.u32 %v451, 4294901760
      %v544 = vsub.f32 %v451, %v543
      %v545 = vand.u32 %v544, 4294901760
      %v546 = vsub.f32 %v544, %v545
      %v547 = vand.u32 %v546, 4294901760
      %548 = vmatmul.mubr.f32.gmra.mxu0 %v547
      %v549 = vpop.f32.mrf.mxu0
      %v550 = vadd.f32 %v444, %v549
      %v551 = vpop.f32.mrf.mxu0
      %552 = vmatprep.mubr.f32.mxu0 0.0
      %v553 = vand.u32 %v454, 4294901760
      %v554 = vsub.f32 %v454, %v553
      %v555 = vand.u32 %v554, 4294901760
      %v556 = vsub.f32 %v554, %v555
      %v557 = vand.u32 %v556, 4294901760
      %558 = vmatmul.mubr.f32.gmra.mxu0 %v557
      %v559 = vpop.f32.mrf.mxu0
      %v560 = vadd.f32 %v444, %v559
      %v561 = vpop.f32.mrf.mxu0
      %562 = vmatprep.mubr.f32.mxu0 0.0
      %v563 = vand.u32 %v457, 4294901760
      %v564 = vsub.f32 %v457, %v563
      %v565 = vand.u32 %v564, 4294901760
      %v566 = vsub.f32 %v564, %v565
      %v567 = vand.u32 %v566, 4294901760
      %568 = vmatmul.mubr.f32.gmra.mxu0 %v567
      %v569 = vpop.f32.mrf.mxu0
      %v570 = vadd.f32 %v444, %v569
      %v571 = vpop.f32.mrf.mxu0
      %572 = vdwg.mxu0
      %573 = vmatprep.subr.mxu0 0.0
      %574 = vmatpush1.msra.mxu0 0.0
      %575 = vmatprep.subr.mxu0 0.0
      %576 = vmatpush1.msra.mxu0 0.0
      %577 = vmatprep.subr.mxu0 0.0
      %578 = vmatpush1.msra.mxu0 0.0
      %579 = vmatprep.subr.mxu0 0.0
      %580 = vmatpush1.msra.mxu0 0.0
      %581 = vmatprep.subr.mxu0 0.0
      %582 = vmatpush1.msra.mxu0 0.0
      %583 = vmatprep.subr.mxu0 0.0
      %584 = vmatpush1.msra.mxu0 0.0
      %585 = vmatprep.subr.mxu0 0.0
      %586 = vmatpush1.msra.mxu0 0.0
      %587 = vmatprep.subr.mxu0 0.0
      %588 = vmatpush1.msra.mxu0 0.0
      %589 = vmatprep.subr.mxu0 0.0
      %590 = vmatpush1.msra.mxu0 0.0
      %591 = vmatprep.subr.mxu0 0.0
      %592 = vmatpush1.msra.mxu0 0.0
      %593 = vmatprep.subr.mxu0 0.0
      %594 = vmatpush1.msra.mxu0 0.0
      %595 = vmatprep.subr.mxu0 0.0
      %v596 = vand.u32 %v461, 4294901760
      %v597 = vsub.f32 %v461, %v596
      %v598 = vand.u32 %v597, 4294901760
      %v599 = vsub.f32 %v597, %v598
      %v600 = vand.u32 %v599, 4294901760
      %601 = vmatpush1.msra.mxu0 %v600
      %602 = vmatprep.subr.mxu0 0.0
      %v603 = vand.u32 %v437, 4294901760
      %v604 = vsub.f32 %v437, %v603
      %v605 = vand.u32 %v604, 4294901760
      %v606 = vsub.f32 %v604, %v605
      %v607 = vand.u32 %v606, 4294901760
      %608 = vmatpush1.msra.mxu0 %v607
      %609 = vmatprep.subr.mxu0 0.0
      %v610 = vand.u32 %v436, 4294901760
      %v611 = vsub.f32 %v436, %v610
      %v612 = vand.u32 %v611, 4294901760
      %v613 = vsub.f32 %v611, %v612
      %v614 = vand.u32 %v613, 4294901760
      %615 = vmatpush1.msra.mxu0 %v614
      %616 = vmatprep.subr.mxu0 0.0
      %v617 = vand.u32 %v435, 4294901760
      %v618 = vsub.f32 %v435, %v617
      %v619 = vand.u32 %v618, 4294901760
      %v620 = vsub.f32 %v618, %v619
      %v621 = vand.u32 %v620, 4294901760
      %622 = vmatpush1.msra.mxu0 %v621
      %623 = vmatprep.subr.mxu0 0.0
      %v624 = vand.u32 %v434, 4294901760
      %v625 = vsub.f32 %v434, %v624
      %v626 = vand.u32 %v625, 4294901760
      %v627 = vsub.f32 %v625, %v626
      %v628 = vand.u32 %v627, 4294901760
      %629 = vmatpush1.msra.mxu0 %v628
      %630 = vmatprep.subr.mxu0 0.0
      %631 = vmatpush2.msra.mxu0 0.0
      %632 = vmatprep.subr.mxu0 0.0
      %633 = vmatpush2.msra.mxu0 0.0
      %634 = vmatprep.subr.mxu0 0.0
      %635 = vmatpush2.msra.mxu0 0.0
      %636 = vmatprep.subr.mxu0 0.0
      %637 = vmatpush2.msra.mxu0 0.0
      %638 = vmatprep.subr.mxu0 0.0
      %639 = vmatpush2.msra.mxu0 0.0
      %640 = vmatprep.subr.mxu0 0.0
      %641 = vmatpush2.msra.mxu0 0.0
      %642 = vmatprep.subr.mxu0 0.0
      %643 = vmatpush2.msra.mxu0 0.0
      %644 = vmatprep.subr.mxu0 0.0
      %645 = vmatpush2.msra.mxu0 0.0
      %646 = vmatprep.subr.mxu0 0.0
      %647 = vmatpush2.msra.mxu0 0.0
      %648 = vmatprep.subr.mxu0 0.0
      %649 = vmatpush2.msra.mxu0 0.0
      %650 = vmatprep.subr.mxu0 0.0
      %651 = vmatpush2.msra.mxu0 0.0
      %652 = vmatprep.subr.mxu0 0.0
      %653 = vmatpush2.msra.mxu0 0.0
      %654 = vmatprep.subr.mxu0 0.0
      %655 = vmatpush2.msra.mxu0 0.0
      %656 = vmatprep.subr.mxu0 0.0
      %657 = vmatpush2.msra.mxu0 0.0
      %658 = vmatprep.subr.mxu0 0.0
      %659 = vmatpush2.msra.mxu0 0.0
      %660 = vmatprep.subr.mxu0 0.0
      %661 = vmatpush2.msra.mxu0 0.0
      %662 = vmatprep.mubr.f32.mxu0 0.0
      %v663 = vand.u32 %v448, 4294901760
      %664 = vmatmul.mubr.f32.gmra.mxu0 %v663
      %v665 = vpop.f32.mrf.mxu0
      %v666 = vadd.f32 %v540, %v665
      %v667 = vpop.f32.mrf.mxu0
      %668 = vmatprep.mubr.f32.mxu0 0.0
      %v669 = vand.u32 %v451, 4294901760
      %670 = vmatmul.mubr.f32.gmra.mxu0 %v669
      %v671 = vpop.f32.mrf.mxu0
      %v672 = vadd.f32 %v550, %v671
      %v673 = vpop.f32.mrf.mxu0
      %674 = vmatprep.mubr.f32.mxu0 0.0
      %v675 = vand.u32 %v454, 4294901760
      %676 = vmatmul.mubr.f32.gmra.mxu0 %v675
      %v677 = vpop.f32.mrf.mxu0
      %v678 = vadd.f32 %v560, %v677
      %v679 = vpop.f32.mrf.mxu0
      %680 = vmatprep.mubr.f32.mxu0 0.0
      %v681 = vand.u32 %v457, 4294901760
      %682 = vmatmul.mubr.f32.gmra.mxu0 %v681
      %v683 = vpop.f32.mrf.mxu0
      %v684 = vadd.f32 %v570, %v683
      %v685 = vpop.f32.mrf.mxu0
      %686 = vdwg.mxu0
      %687 = vmatprep.subr.mxu0 0.0
      %688 = vmatpush1.msra.mxu0 0.0
      %689 = vmatprep.subr.mxu0 0.0
      %690 = vmatpush1.msra.mxu0 0.0
      %691 = vmatprep.subr.mxu0 0.0
      %692 = vmatpush1.msra.mxu0 0.0
      %693 = vmatprep.subr.mxu0 0.0
      %694 = vmatpush1.msra.mxu0 0.0
      %695 = vmatprep.subr.mxu0 0.0
      %696 = vmatpush1.msra.mxu0 0.0
      %697 = vmatprep.subr.mxu0 0.0
      %698 = vmatpush1.msra.mxu0 0.0
      %699 = vmatprep.subr.mxu0 0.0
      %700 = vmatpush1.msra.mxu0 0.0
      %701 = vmatprep.subr.mxu0 0.0
      %702 = vmatpush1.msra.mxu0 0.0
      %703 = vmatprep.subr.mxu0 0.0
      %704 = vmatpush1.msra.mxu0 0.0
      %705 = vmatprep.subr.mxu0 0.0
      %706 = vmatpush1.msra.mxu0 0.0
      %707 = vmatprep.subr.mxu0 0.0
      %708 = vmatpush1.msra.mxu0 0.0
      %709 = vmatprep.subr.mxu0 0.0
      %v710 = vand.u32 %v461, 4294901760
      %v711 = vsub.f32 %v461, %v710
      %712 = vmatpush1.msra.mxu0 %v711
      %713 = vmatprep.subr.mxu0 0.0
      %v714 = vand.u32 %v437, 4294901760
      %v715 = vsub.f32 %v437, %v714
      %716 = vmatpush1.msra.mxu0 %v715
      %717 = vmatprep.subr.mxu0 0.0
      %v718 = vand.u32 %v436, 4294901760
      %v719 = vsub.f32 %v436, %v718
      %720 = vmatpush1.msra.mxu0 %v719
      %721 = vmatprep.subr.mxu0 0.0
      %v722 = vand.u32 %v435, 4294901760
      %v723 = vsub.f32 %v435, %v722
      %724 = vmatpush1.msra.mxu0 %v723
      %725 = vmatprep.subr.mxu0 0.0
      %v726 = vand.u32 %v434, 4294901760
      %v727 = vsub.f32 %v434, %v726
      %728 = vmatpush1.msra.mxu0 %v727
      %729 = vmatprep.subr.mxu0 0.0
      %730 = vmatpush2.msra.mxu0 0.0
      %731 = vmatprep.subr.mxu0 0.0
      %732 = vmatpush2.msra.mxu0 0.0
      %733 = vmatprep.subr.mxu0 0.0
      %734 = vmatpush2.msra.mxu0 0.0
      %735 = vmatprep.subr.mxu0 0.0
      %736 = vmatpush2.msra.mxu0 0.0
      %737 = vmatprep.subr.mxu0 0.0
      %738 = vmatpush2.msra.mxu0 0.0
      %739 = vmatprep.subr.mxu0 0.0
      %740 = vmatpush2.msra.mxu0 0.0
      %741 = vmatprep.subr.mxu0 0.0
      %742 = vmatpush2.msra.mxu0 0.0
      %743 = vmatprep.subr.mxu0 0.0
      %744 = vmatpush2.msra.mxu0 0.0
      %745 = vmatprep.subr.mxu0 0.0
      %746 = vmatpush2.msra.mxu0 0.0
      %747 = vmatprep.subr.mxu0 0.0
      %748 = vmatpush2.msra.mxu0 0.0
      %749 = vmatprep.subr.mxu0 0.0
      %750 = vmatpush2.msra.mxu0 0.0
      %751 = vmatprep.subr.mxu0 0.0
      %752 = vmatpush2.msra.mxu0 0.0
      %753 = vmatprep.subr.mxu0 0.0
      %754 = vmatpush2.msra.mxu0 0.0
      %755 = vmatprep.subr.mxu0 0.0
      %756 = vmatpush2.msra.mxu0 0.0
      %757 = vmatprep.subr.mxu0 0.0
      %758 = vmatpush2.msra.mxu0 0.0
      %759 = vmatprep.subr.mxu0 0.0
      %760 = vmatpush2.msra.mxu0 0.0
      %761 = vmatprep.mubr.f32.mxu0 0.0
      %v762 = vand.u32 %v448, 4294901760
      %v763 = vsub.f32 %v448, %v762
      %764 = vmatmul.mubr.f32.gmra.mxu0 %v763
      %v765 = vpop.f32.mrf.mxu0
      %v766 = vadd.f32 %v666, %v765
      %v767 = vpop.f32.mrf.mxu0
      %768 = vmatprep.mubr.f32.mxu0 0.0
      %v769 = vand.u32 %v451, 4294901760
      %v770 = vsub.f32 %v451, %v769
      %771 = vmatmul.mubr.f32.gmra.mxu0 %v770
      %v772 = vpop.f32.mrf.mxu0
      %v773 = vadd.f32 %v672, %v772
      %v774 = vpop.f32.mrf.mxu0
      %775 = vmatprep.mubr.f32.mxu0 0.0
      %v776 = vand.u32 %v454, 4294901760
      %v777 = vsub.f32 %v454, %v776
      %778 = vmatmul.mubr.f32.gmra.mxu0 %v777
      %v779 = vpop.f32.mrf.mxu0
      %v780 = vadd.f32 %v678, %v779
      %v781 = vpop.f32.mrf.mxu0
      %782 = vmatprep.mubr.f32.mxu0 0.0
      %v783 = vand.u32 %v457, 4294901760
      %v784 = vsub.f32 %v457, %v783
      %785 = vmatmul.mubr.f32.gmra.mxu0 %v784
      %v786 = vpop.f32.mrf.mxu0
      %v787 = vadd.f32 %v684, %v786
      %v788 = vpop.f32.mrf.mxu0
      %789 = vdwg.mxu0
      %790 = vmatprep.subr.mxu0 0.0
      %791 = vmatpush1.msra.mxu0 0.0
      %792 = vmatprep.subr.mxu0 0.0
      %793 = vmatpush1.msra.mxu0 0.0
      %794 = vmatprep.subr.mxu0 0.0
      %795 = vmatpush1.msra.mxu0 0.0
      %796 = vmatprep.subr.mxu0 0.0
      %797 = vmatpush1.msra.mxu0 0.0
      %798 = vmatprep.subr.mxu0 0.0
      %799 = vmatpush1.msra.mxu0 0.0
      %800 = vmatprep.subr.mxu0 0.0
      %801 = vmatpush1.msra.mxu0 0.0
      %802 = vmatprep.subr.mxu0 0.0
      %803 = vmatpush1.msra.mxu0 0.0
      %804 = vmatprep.subr.mxu0 0.0
      %805 = vmatpush1.msra.mxu0 0.0
      %806 = vmatprep.subr.mxu0 0.0
      %807 = vmatpush1.msra.mxu0 0.0
      %808 = vmatprep.subr.mxu0 0.0
      %809 = vmatpush1.msra.mxu0 0.0
      %810 = vmatprep.subr.mxu0 0.0
      %811 = vmatpush1.msra.mxu0 0.0
      %812 = vmatprep.subr.mxu0 0.0
      %v813 = vand.u32 %v461, 4294901760
      %814 = vmatpush1.msra.mxu0 %v813
      %815 = vmatprep.subr.mxu0 0.0
      %v816 = vand.u32 %v437, 4294901760
      %817 = vmatpush1.msra.mxu0 %v816
      %818 = vmatprep.subr.mxu0 0.0
      %v819 = vand.u32 %v436, 4294901760
      %820 = vmatpush1.msra.mxu0 %v819
      %821 = vmatprep.subr.mxu0 0.0
      %v822 = vand.u32 %v435, 4294901760
      %823 = vmatpush1.msra.mxu0 %v822
      %824 = vmatprep.subr.mxu0 0.0
      %v825 = vand.u32 %v434, 4294901760
      %826 = vmatpush1.msra.mxu0 %v825
      %827 = vmatprep.subr.mxu0 0.0
      %828 = vmatpush2.msra.mxu0 0.0
      %829 = vmatprep.subr.mxu0 0.0
      %830 = vmatpush2.msra.mxu0 0.0
      %831 = vmatprep.subr.mxu0 0.0
      %832 = vmatpush2.msra.mxu0 0.0
      %833 = vmatprep.subr.mxu0 0.0
      %834 = vmatpush2.msra.mxu0 0.0
      %835 = vmatprep.subr.mxu0 0.0
      %836 = vmatpush2.msra.mxu0 0.0
      %837 = vmatprep.subr.mxu0 0.0
      %838 = vmatpush2.msra.mxu0 0.0
      %839 = vmatprep.subr.mxu0 0.0
      %840 = vmatpush2.msra.mxu0 0.0
      %841 = vmatprep.subr.mxu0 0.0
      %842 = vmatpush2.msra.mxu0 0.0
      %843 = vmatprep.subr.mxu0 0.0
      %844 = vmatpush2.msra.mxu0 0.0
      %845 = vmatprep.subr.mxu0 0.0
      %846 = vmatpush2.msra.mxu0 0.0
      %847 = vmatprep.subr.mxu0 0.0
      %848 = vmatpush2.msra.mxu0 0.0
      %849 = vmatprep.subr.mxu0 0.0
      %850 = vmatpush2.msra.mxu0 0.0
      %851 = vmatprep.subr.mxu0 0.0
      %852 = vmatpush2.msra.mxu0 0.0
      %853 = vmatprep.subr.mxu0 0.0
      %854 = vmatpush2.msra.mxu0 0.0
      %855 = vmatprep.subr.mxu0 0.0
      %856 = vmatpush2.msra.mxu0 0.0
      %857 = vmatprep.subr.mxu0 0.0
      %858 = vmatpush2.msra.mxu0 0.0
      %859 = vmatprep.mubr.f32.mxu0 0.0
      %v860 = vand.u32 %v448, 4294901760
      %v861 = vsub.f32 %v448, %v860
      %v862 = vand.u32 %v861, 4294901760
      %863 = vmatmul.mubr.f32.gmra.mxu0 %v862
      %v864 = vpop.f32.mrf.mxu0
      %v865 = vadd.f32 %v766, %v864
      %v866 = vpop.f32.mrf.mxu0
      %867 = vmatprep.mubr.f32.mxu0 0.0
      %v868 = vand.u32 %v451, 4294901760
      %v869 = vsub.f32 %v451, %v868
      %v870 = vand.u32 %v869, 4294901760
      %871 = vmatmul.mubr.f32.gmra.mxu0 %v870
      %v872 = vpop.f32.mrf.mxu0
      %v873 = vadd.f32 %v773, %v872
      %v874 = vpop.f32.mrf.mxu0
      %875 = vmatprep.mubr.f32.mxu0 0.0
      %v876 = vand.u32 %v454, 4294901760
      %v877 = vsub.f32 %v454, %v876
      %v878 = vand.u32 %v877, 4294901760
      %879 = vmatmul.mubr.f32.gmra.mxu0 %v878
      %v880 = vpop.f32.mrf.mxu0
      %v881 = vadd.f32 %v780, %v880
      %v882 = vpop.f32.mrf.mxu0
      %883 = vmatprep.mubr.f32.mxu0 0.0
      %v884 = vand.u32 %v457, 4294901760
      %v885 = vsub.f32 %v457, %v884
      %v886 = vand.u32 %v885, 4294901760
      %887 = vmatmul.mubr.f32.gmra.mxu0 %v886
      %v888 = vpop.f32.mrf.mxu0
      %v889 = vadd.f32 %v787, %v888
      %v890 = vpop.f32.mrf.mxu0
      %891 = vdwg.mxu0
      %892 = vmatprep.subr.mxu0 0.0
      %893 = vmatpush1.msra.mxu0 0.0
      %894 = vmatprep.subr.mxu0 0.0
      %895 = vmatpush1.msra.mxu0 0.0
      %896 = vmatprep.subr.mxu0 0.0
      %897 = vmatpush1.msra.mxu0 0.0
      %898 = vmatprep.subr.mxu0 0.0
      %899 = vmatpush1.msra.mxu0 0.0
      %900 = vmatprep.subr.mxu0 0.0
      %901 = vmatpush1.msra.mxu0 0.0
      %902 = vmatprep.subr.mxu0 0.0
      %903 = vmatpush1.msra.mxu0 0.0
      %904 = vmatprep.subr.mxu0 0.0
      %905 = vmatpush1.msra.mxu0 0.0
      %906 = vmatprep.subr.mxu0 0.0
      %907 = vmatpush1.msra.mxu0 0.0
      %908 = vmatprep.subr.mxu0 0.0
      %909 = vmatpush1.msra.mxu0 0.0
      %910 = vmatprep.subr.mxu0 0.0
      %911 = vmatpush1.msra.mxu0 0.0
      %912 = vmatprep.subr.mxu0 0.0
      %913 = vmatpush1.msra.mxu0 0.0
      %914 = vmatprep.subr.mxu0 0.0
      %v915 = vand.u32 %v461, 4294901760
      %v916 = vsub.f32 %v461, %v915
      %v917 = vand.u32 %v916, 4294901760
      %918 = vmatpush1.msra.mxu0 %v917
      %919 = vmatprep.subr.mxu0 0.0
      %v920 = vand.u32 %v437, 4294901760
      %v921 = vsub.f32 %v437, %v920
      %v922 = vand.u32 %v921, 4294901760
      %923 = vmatpush1.msra.mxu0 %v922
      %924 = vmatprep.subr.mxu0 0.0
      %v925 = vand.u32 %v436, 4294901760
      %v926 = vsub.f32 %v436, %v925
      %v927 = vand.u32 %v926, 4294901760
      %928 = vmatpush1.msra.mxu0 %v927
      %929 = vmatprep.subr.mxu0 0.0
      %v930 = vand.u32 %v435, 4294901760
      %v931 = vsub.f32 %v435, %v930
      %v932 = vand.u32 %v931, 4294901760
      %933 = vmatpush1.msra.mxu0 %v932
      %934 = vmatprep.subr.mxu0 0.0
      %v935 = vand.u32 %v434, 4294901760
      %v936 = vsub.f32 %v434, %v935
      %v937 = vand.u32 %v936, 4294901760
      %938 = vmatpush1.msra.mxu0 %v937
      %939 = vmatprep.subr.mxu0 0.0
      %940 = vmatpush2.msra.mxu0 0.0
      %941 = vmatprep.subr.mxu0 0.0
      %942 = vmatpush2.msra.mxu0 0.0
      %943 = vmatprep.subr.mxu0 0.0
      %944 = vmatpush2.msra.mxu0 0.0
      %945 = vmatprep.subr.mxu0 0.0
      %946 = vmatpush2.msra.mxu0 0.0
      %947 = vmatprep.subr.mxu0 0.0
      %948 = vmatpush2.msra.mxu0 0.0
      %949 = vmatprep.subr.mxu0 0.0
      %950 = vmatpush2.msra.mxu0 0.0
      %951 = vmatprep.subr.mxu0 0.0
      %952 = vmatpush2.msra.mxu0 0.0
      %953 = vmatprep.subr.mxu0 0.0
      %954 = vmatpush2.msra.mxu0 0.0
      %955 = vmatprep.subr.mxu0 0.0
      %956 = vmatpush2.msra.mxu0 0.0
      %957 = vmatprep.subr.mxu0 0.0
      %958 = vmatpush2.msra.mxu0 0.0
      %959 = vmatprep.subr.mxu0 0.0
      %960 = vmatpush2.msra.mxu0 0.0
      %961 = vmatprep.subr.mxu0 0.0
      %962 = vmatpush2.msra.mxu0 0.0
      %963 = vmatprep.subr.mxu0 0.0
      %964 = vmatpush2.msra.mxu0 0.0
      %965 = vmatprep.subr.mxu0 0.0
      %966 = vmatpush2.msra.mxu0 0.0
      %967 = vmatprep.subr.mxu0 0.0
      %968 = vmatpush2.msra.mxu0 0.0
      %969 = vmatprep.subr.mxu0 0.0
      %970 = vmatpush2.msra.mxu0 0.0
      %971 = vmatprep.mubr.f32.mxu0 0.0
      %v972 = vand.u32 %v448, 4294901760
      %973 = vmatmul.mubr.f32.gmra.mxu0 %v972
      %v974 = vpop.f32.mrf.mxu0
      %v975 = vadd.f32 %v865, %v974
      %v976 = vpop.f32.mrf.mxu0
      %977 = vmatprep.mubr.f32.mxu0 0.0
      %v978 = vand.u32 %v451, 4294901760
      %979 = vmatmul.mubr.f32.gmra.mxu0 %v978
      %v980 = vpop.f32.mrf.mxu0
      %v981 = vadd.f32 %v873, %v980
      %v982 = vpop.f32.mrf.mxu0
      %983 = vmatprep.mubr.f32.mxu0 0.0
      %v984 = vand.u32 %v454, 4294901760
      %985 = vmatmul.mubr.f32.gmra.mxu0 %v984
      %v986 = vpop.f32.mrf.mxu0
      %v987 = vadd.f32 %v881, %v986
      %v988 = vpop.f32.mrf.mxu0
      %989 = vmatprep.mubr.f32.mxu0 0.0
      %v990 = vand.u32 %v457, 4294901760
      %991 = vmatmul.mubr.f32.gmra.mxu0 %v990
      %v992 = vpop.f32.mrf.mxu0
      %v993 = vadd.f32 %v889, %v992
      %v994 = vpop.f32.mrf.mxu0
      %995 = vdwg.mxu0
      %996 = vmatprep.subr.mxu0 0.0
      %997 = vmatpush1.msra.mxu0 0.0
      %998 = vmatprep.subr.mxu0 0.0
      %999 = vmatpush1.msra.mxu0 0.0
      %1000 = vmatprep.subr.mxu0 0.0
      %1001 = vmatpush1.msra.mxu0 0.0
      %1002 = vmatprep.subr.mxu0 0.0
      %1003 = vmatpush1.msra.mxu0 0.0
      %1004 = vmatprep.subr.mxu0 0.0
      %1005 = vmatpush1.msra.mxu0 0.0
      %1006 = vmatprep.subr.mxu0 0.0
      %1007 = vmatpush1.msra.mxu0 0.0
      %1008 = vmatprep.subr.mxu0 0.0
      %1009 = vmatpush1.msra.mxu0 0.0
      %1010 = vmatprep.subr.mxu0 0.0
      %1011 = vmatpush1.msra.mxu0 0.0
      %1012 = vmatprep.subr.mxu0 0.0
      %1013 = vmatpush1.msra.mxu0 0.0
      %1014 = vmatprep.subr.mxu0 0.0
      %1015 = vmatpush1.msra.mxu0 0.0
      %1016 = vmatprep.subr.mxu0 0.0
      %1017 = vmatpush1.msra.mxu0 0.0
      %1018 = vmatprep.subr.mxu0 0.0
      %v1019 = vand.u32 %v461, 4294901760
      %1020 = vmatpush1.msra.mxu0 %v1019
      %1021 = vmatprep.subr.mxu0 0.0
      %v1022 = vand.u32 %v437, 4294901760
      %1023 = vmatpush1.msra.mxu0 %v1022
      %1024 = vmatprep.subr.mxu0 0.0
      %v1025 = vand.u32 %v436, 4294901760
      %1026 = vmatpush1.msra.mxu0 %v1025
      %1027 = vmatprep.subr.mxu0 0.0
      %v1028 = vand.u32 %v435, 4294901760
      %1029 = vmatpush1.msra.mxu0 %v1028
      %1030 = vmatprep.subr.mxu0 0.0
      %v1031 = vand.u32 %v434, 4294901760
      %1032 = vmatpush1.msra.mxu0 %v1031
      %1033 = vmatprep.subr.mxu0 0.0
      %1034 = vmatpush2.msra.mxu0 0.0
      %1035 = vmatprep.subr.mxu0 0.0
      %1036 = vmatpush2.msra.mxu0 0.0
      %1037 = vmatprep.subr.mxu0 0.0
      %1038 = vmatpush2.msra.mxu0 0.0
      %1039 = vmatprep.subr.mxu0 0.0
      %1040 = vmatpush2.msra.mxu0 0.0
      %1041 = vmatprep.subr.mxu0 0.0
      %1042 = vmatpush2.msra.mxu0 0.0
      %1043 = vmatprep.subr.mxu0 0.0
      %1044 = vmatpush2.msra.mxu0 0.0
      %1045 = vmatprep.subr.mxu0 0.0
      %1046 = vmatpush2.msra.mxu0 0.0
      %1047 = vmatprep.subr.mxu0 0.0
      %1048 = vmatpush2.msra.mxu0 0.0
      %1049 = vmatprep.subr.mxu0 0.0
      %1050 = vmatpush2.msra.mxu0 0.0
      %1051 = vmatprep.subr.mxu0 0.0
      %1052 = vmatpush2.msra.mxu0 0.0
      %1053 = vmatprep.subr.mxu0 0.0
      %1054 = vmatpush2.msra.mxu0 0.0
      %1055 = vmatprep.subr.mxu0 0.0
      %1056 = vmatpush2.msra.mxu0 0.0
      %1057 = vmatprep.subr.mxu0 0.0
      %1058 = vmatpush2.msra.mxu0 0.0
      %1059 = vmatprep.subr.mxu0 0.0
      %1060 = vmatpush2.msra.mxu0 0.0
      %1061 = vmatprep.subr.mxu0 0.0
      %1062 = vmatpush2.msra.mxu0 0.0
      %1063 = vmatprep.subr.mxu0 0.0
      %1064 = vmatpush2.msra.mxu0 0.0
      %1065 = vmatprep.mubr.f32.mxu0 0.0
      %v1066 = vand.u32 %v448, 4294901760
      %1067 = vmatmul.mubr.f32.gmra.mxu0 %v1066
      %v1068 = vpop.f32.mrf.mxu0
      %v1069 = vadd.f32 %v975, %v1068
      %v1070 = vpop.f32.mrf.mxu0
      %1071 = vmatprep.mubr.f32.mxu0 0.0
      %v1072 = vand.u32 %v451, 4294901760
      %1073 = vmatmul.mubr.f32.gmra.mxu0 %v1072
      %v1074 = vpop.f32.mrf.mxu0
      %v1075 = vadd.f32 %v981, %v1074
      %v1076 = vpop.f32.mrf.mxu0
      %1077 = vmatprep.mubr.f32.mxu0 0.0
      %v1078 = vand.u32 %v454, 4294901760
      %1079 = vmatmul.mubr.f32.gmra.mxu0 %v1078
      %v1080 = vpop.f32.mrf.mxu0
      %v1081 = vadd.f32 %v987, %v1080
      %v1082 = vpop.f32.mrf.mxu0
      %1083 = vmatprep.mubr.f32.mxu0 0.0
      %v1084 = vand.u32 %v457, 4294901760
      %1085 = vmatmul.mubr.f32.gmra.mxu0 %v1084
      %v1086 = vpop.f32.mrf.mxu0
      %v1087 = vadd.f32 %v993, %v1086
      %v1088 = vpop.f32.mrf.mxu0
      %1089 = vdwg.mxu0
      %vm1090 = vcmask 31744
      %1091 = vst.msk [vmem:[%s311] sm:$0xff] %vm1090, %v1069
      %1092 = vst.msk [vmem:[%s311 + $0x8] sm:$0xff] %vm1090, %v1075
      %1093 = vst.msk [vmem:[%s311 + $0x10] sm:$0xff] %vm1090, %v1081
      %1094 = vst.msk [vmem:[%s311 + $0x18] sm:$0xff] %vm1090, %v1087
      %s1095 = smul.u32 4, %s20
      %p1096 = scmp.lt.s32.totalorder %s19, 1
      %s1097 = scalar_select %p1096, %s19, 1
      %p1098 = scmp.lt.s32.totalorder %s1095, 7
      %s1099 = scalar_select %p1098, %s1095, 7
      %s1100 = smul.addr %s1097, 8
      %s1101 = sadd.s32 %s1099, %s1100
      %s1102 = smul.addr %s1101, 8
      %s1103 = scalar_lea.vmem %s4, %s1102
      // Predicated region
      $region37: #{downsample.1} parent=35 // pred_check
        %p1104 = pneg %p149
      $region38: #{downsample.1} parent=35 // pred_check_branch
        %1106 = sbr.rel (%p1104) target = $region40
      $region39: #{downsample.1} parent=35 // pred_region
        %s1107 = smul.u32 4, %s20
      $region40: #{downsample.1} parent=35 // pred_fallthru
        _
    $region36: #{downsample.1} parent=5 // pred_fallthru
      _
    %p1108 = scmp.le.s32.totalorder 2, %s10
    // Predicated region
    $region41: #{downsample.1} parent=5 // pred_check
      %p1109 = pneg %p1108
    $region42: #{downsample.1} parent=5 // pred_check_branch
      %1111 = sbr.rel (%p1109) target = $region44
    $region43: #{downsample.1} parent=5 // pred_region
      %s1112 = ssub.s32 %s10, 2
      // Predicated region
      $region45: #{downsample.1} parent=43 // pred_check
        %p1113 = pneg %p155
      $region46: #{downsample.1} parent=43 // pred_check_branch
        %1115 = sbr.rel (%p1113) target = $region48
      $region47: #{downsample.1} parent=43 // pred_region
        %s1116 = smul.u32 4, %s22
        %p1117 = scmp.lt.s32.totalorder %s21, 1
        %s1118 = scalar_select %p1117, %s21, 1
        %p1119 = scmp.lt.s32.totalorder %s1116, 7
        %s1120 = scalar_select %p1119, %s1116, 7
        %s1121 = smul.addr %s1118, 8
        %s1122 = sadd.s32 %s1120, %s1121
        %s1123 = smul.addr %s1122, 8
        %s1124 = scalar_lea.vmem %s4, %s1123
      $region48: #{downsample.1} parent=43 // pred_fallthru
        _
    $region44: #{downsample.1} parent=5 // pred_fallthru
      _
  $region6: #{downsample.1} parent=0 // loop_footer
    %s14 = sadd.s32 1, %s10
  $region7: #{downsample.1} parent=0 // loop_footer_branch
    %9 = sbr.rel target = $region3
  $region8: #{downsample.1} parent=0 // loop_exit
    _

</llo_original>
